<compile_context>
chip_gen: v5e
topology: v5e:2x2
jax: 0.10.0
libtpu: 0.0.40
codegen_flags: <defaults>
</compile_context>

<pallas_src>
import functools

import jax
import jax.numpy as jnp
from jax import lax
from jax.experimental import pallas as pl
from jax.experimental.pallas import tpu as pltpu


def _rbf_kernel(h_ref, o_ref, *, gamma, vmin, step, chunk):
    """One grid step: expand a (1, tile) slab of angle features into the
    (tile, bins) output block, stored directly in the final row-major layout."""
    bins = o_ref.shape[1]
    rows = o_ref.shape[0]

    # centers c[b] = vmin + b*step as a (bins, 1) column; hoisted out of the
    # chunk loop (no full-tile iota, no per-element center math).
    b_idx = lax.broadcasted_iota(jnp.int32, (bins, 1), 0).astype(jnp.float32)
    c = vmin + step * b_idx                                # (bins, 1)
    neg_gamma = jnp.float32(-gamma)

    for j in range(rows // chunk):                         # static, fully unrolled
        lo = j * chunk
        h = h_ref[:, lo:lo + chunk].astype(jnp.float32)    # (1, chunk), edges on lanes
        d = h - c                                          # (bins, chunk) via broadcast
        zt = jnp.exp(neg_gamma * d * d)                    # (bins, chunk), compact f32
        # Minor-dim swap into the (rows, bins) store layout; rides the XLU slot.
        # (pltpu.einshape("bt->tb", zt) is an equivalent alternative.)
        o_ref[lo:lo + chunk, :] = jnp.transpose(zt).astype(o_ref.dtype)


def _choose_tile_rows(n, max_tile_rows, *, row_quantum=512, target_steps=8):
    """Output row-tile: a multiple of row_quantum, <= max_tile_rows, aiming for
    >= target_steps grid steps (v7x megacore) and small padded-write waste."""
    max_tile_rows = max(row_quantum, (max_tile_rows // row_quantum) * row_quantum)
    desired = -(-n // target_steps)                        # ~ n / target_steps
    desired = -(-desired // row_quantum) * row_quantum     # round up to quantum
    return max(row_quantum, min(max_tile_rows, desired))


def rbf_expansion_pallas(
    h,
    *,
    vmin=-1.0,
    vmax=1.0,
    bins=40,
    max_tile_rows=8192,
    out_dtype=jnp.float32,   # jnp.bfloat16 halves store bytes if downstream accepts it
):
    """h: (N,) angle features. Returns z: (N, bins) = exp(-gamma*(h-c)^2)."""
    n = int(h.shape[0])
    step = (vmax - vmin) / (bins - 1)     # mean(diff(centers))
    gamma = 1.0 / step                    # RBFExpansion lengthscale=None path

    tile = _choose_tile_rows(n, max_tile_rows)
    chunk = min(512, tile)
    assert tile % chunk == 0
    grid = pl.cdiv(n, tile)
    n_pad = grid * tile

    h = h.astype(jnp.float32)
    if n_pad != n:
        h = jnp.pad(h, (0, n_pad - n))    # input-side pad only (N*4 bytes; output stays exact)
    h2 = h.reshape(1, n_pad)              # edges on the 128-lane axis for dense input DMA

    kernel = functools.partial(
        _rbf_kernel,
        gamma=float(gamma), vmin=float(vmin), step=float(step), chunk=int(chunk),
    )

    return pl.pallas_call(
        kernel,
        out_shape=jax.ShapeDtypeStruct((n, bins), out_dtype),  # exact N: no post slice
        grid_spec=pltpu.PrefetchScalarGridSpec(
            num_scalar_prefetch=0,
            grid=(grid,),
            in_specs=[pl.BlockSpec((1, tile), lambda i: (0, i))],
            out_specs=pl.BlockSpec((tile, bins), lambda i: (i, 0)),
        ),
        compiler_params=pltpu.CompilerParams(
            dimension_semantics=("parallel",),
            vmem_limit_bytes=32 * 1024 * 1024,
        ),
    )(h2)


def alignn_forward(angle_features, *, vmin=-1.0, vmax=1.0, bins=40):
    """Equivalent of ALIGNN.forward: z = angle_embedding(lg.edata.pop('h'))."""
    # TODO(synk): DGL graph handling (g/lg unpack, local_var, edata.pop) is pure
    # data plumbing; the caller passes the line-graph edge features directly.
    return rbf_expansion_pallas(angle_features, vmin=vmin, vmax=vmax, bins=bins)


if __name__ == "__main__":
    key = jax.random.PRNGKey(0)
    # Line-graph edge features (cosines of triplet angles in [-1, 1]).
    # Ragged on purpose (not a tile multiple) to exercise masked boundary writes
    # and a multi-step grid.
    num_lg_edges = 1000
    triplet_input_features = 40  # config.triplet_input_features (ALIGNN default)

    h = jax.random.uniform(
        key, (num_lg_edges,), minval=-1.0, maxval=1.0, dtype=jnp.float32
    )

    z = alignn_forward(h, vmin=-1.0, vmax=1.0, bins=triplet_input_features)
    z = jax.block_until_ready(z)

    # Plain-JAX reference of the PyTorch semantics.
    centers = jnp.linspace(-1.0, 1.0, triplet_input_features, dtype=jnp.float32)
    lengthscale = (1.0 - (-1.0)) / (triplet_input_features - 1)
    gamma = 1.0 / lengthscale
    z_ref = jnp.exp(-gamma * (h[:, None] - centers[None, :]) ** 2)

    assert z.shape == (num_lg_edges, triplet_input_features)
    max_err = float(jnp.max(jnp.abs(z.astype(jnp.float32) - z_ref)))
    assert max_err < 1e-5, max_err

    print("KERNEL_OK")
</pallas_src>

<mosaic_0001>
module attributes {stable_mosaic.version = 11 : i64} {
  func.func @_rbf_kernel(%arg0: i32, %arg1: memref<1x512xf32, #tpu.memory_space<vmem>>, %arg2: memref<512x40xf32, #tpu.memory_space<vmem>>) attributes {dimension_semantics = [#tpu.dimension_semantics<parallel>], iteration_bounds = array<i64: 2>, scalar_prefetch = 0 : i64, scratch_operands = 0 : i64, tpu.core_type = #tpu.core_type<tc>, window_params = [{transform_indices = @transform_0, window_bounds = array<i64: 1, 512>}, {transform_indices = @transform_1, window_bounds = array<i64: 512, 40>}]} {
    %0 = tpu.iota {dimensions = array<i32: 0>} : vector<40x1xi32>
    %1 = arith.sitofp %0 : vector<40x1xi32> to vector<40x1xf32>
    %cst = arith.constant 0.051282052 : f32
    %2 = vector.broadcast %cst : f32 to vector<40x1xf32>
    %3 = arith.mulf %2, %1 : vector<40x1xf32>
    %cst_0 = arith.constant -1.000000e+00 : f32
    %4 = vector.broadcast %cst_0 : f32 to vector<40x1xf32>
    %5 = arith.addf %4, %3 : vector<40x1xf32>
    %c0 = arith.constant 0 : index
    %c0_1 = arith.constant 0 : index
    %6 = vector.load %arg1[%c0, %c0_1] : memref<1x512xf32, #tpu.memory_space<vmem>>, vector<1x512xf32>
    %7 = vector.broadcast %6 : vector<1x512xf32> to vector<40x512xf32>
    %8 = vector.broadcast %5 : vector<40x1xf32> to vector<40x512xf32>
    %9 = arith.subf %7, %8 : vector<40x512xf32>
    %cst_2 = arith.constant -1.950000e+01 : f32
    %10 = vector.broadcast %cst_2 : f32 to vector<40x512xf32>
    %11 = arith.mulf %10, %9 : vector<40x512xf32>
    %12 = arith.mulf %11, %9 : vector<40x512xf32>
    %13 = math.exp %12 : vector<40x512xf32>
    %14 = tpu.transpose %13, [1, 0] : vector<40x512xf32> -> vector<512x40xf32>
    %c0_3 = arith.constant 0 : index
    %c0_4 = arith.constant 0 : index
    %15 = vector.load %arg2[%c0_3, %c0_4] : memref<512x40xf32, #tpu.memory_space<vmem>>, vector<512x40xf32>
    tpu.vector_store %arg2[%c0_3, %c0_4], %14 {strides = array<i32>} : memref<512x40xf32, #tpu.memory_space<vmem>>, vector<512x40xf32>,
    return
  }
  func.func @transform_0(%arg0: i32) -> (i32, i32) {
    %c0_i32 = arith.constant 0 : i32
    %c0_i32_0 = arith.constant 0 : i32
    return %c0_i32, %arg0 : i32, i32
  }
  func.func @transform_1(%arg0: i32) -> (i32, i32) {
    %c0_i32 = arith.constant 0 : i32
    %c0_i32_0 = arith.constant 0 : i32
    return %arg0, %c0_i32 : i32, i32
  }
}

</mosaic_0001>

<llo_original>
// kernel: tpu_custom_call.1
$region0: #{tpu_custom_call.1}
  #allocation0 [shape = 'u32[]', space=smem, size = 0x4, offset = 0x4, fixed_abs, tag = 'smem constant byte address 0x4 - core index']
  #allocation1 [shape = 'u32[72,128]{1,0:T(1,128)}', space=vmem, size = 0x9000, scoped, tag = 'internal scratch']
  %s0 = inlined_call_operand.hbm [shape: f32[1,1024], index: 0, kind: input, shape index: {}]
  %s1 = inlined_call_operand.vmem [shape: f32[1000,40], index: 1, kind: output, shape index: {}]
  %s2 = sld [smem:[#allocation0]]
  $region89: #{tpu_custom_call.1} parent=0
    _
  %s4 = ssub.s32 1, %s2
  %s5 = scalar_select 0, %s4, %s2
  $region1: #{tpu_custom_call.1} parent=0
    #allocation2 [shape = 'u8[4096]{0}', space=vmem, size = 0x1000, scoped, tag = 'input window, operand 0']
    #allocation3 [shape = 's32[2]{0}', space=sflag, size = 0x8, scoped, tag = 'scoped memory for tpu_custom_call.1']
    #allocation4 [shape = 'u8[524288]{0}', space=vmem, size = 0x80000, scoped, tag = 'output window, operand 0']
    %6 = vsyncpa [#allocation3], 0
    %s7 = scalar_lea.sflag [#allocation3], 1
    %8 = vsyncpa %s7, 0
    loop: start=0, step=1, limit=4
    $region2: #{tpu_custom_call.1} parent=1 // loop_pre_header
      _
    $region3: #{tpu_custom_call.1} parent=1 // loop_header
      %s10 = sphi 0, %s14
      %p11 = scmp.ge.s32.totalorder %s10, 4
      %s20 = sphi 0, %s22
      %s23 = sphi 0, %s20
      %s24 = sphi 0, %s23
      %s40 = sphi 0, %s24
      %s46 = sphi 0, %s48
      %s49 = sphi 0, %s46
      %s50 = sphi 0, %s49
      %s66 = sphi 0, %s50
    $region4: #{tpu_custom_call.1} parent=1 // loop_header_branch
      %13 = sbr.rel (%p11) target = $region8
    $region5: #{tpu_custom_call.1} parent=1 // loop_body
      %s15 = ssub.s32 %s10, 1
      %s16 = ssub.s32 %s10, 2
      %s17 = sadd.s32 %s10, 1
      %s18 = ssub.s32 %s10, %s17
      %p19 = scmp.eq.s32.totalorder %s18, 0
      %s21 = sadd.s32 %s20, 1
      %s22 = scalar_select %p19, %s20, %s21
      %p25 = pneg %p19
      %p26 = scmp.eq.s32.totalorder %s10, 1
      %p27 = por %p25, %p26
      %p28 = scmp.ne.s32.totalorder %s20, %s23
      %p29 = scmp.eq.s32.totalorder %s10, 0
      %p30 = por %p28, %p29
      %p31 = scmp.ne.s32.totalorder %s20, %s23
      %p32 = scmp.eq.s32.totalorder %s15, 1
      %p33 = por %p31, %p32
      %p34 = scmp.ne.s32.totalorder %s23, %s24
      %p35 = scmp.eq.s32.totalorder %s15, 0
      %p36 = por %p34, %p35
      %p37 = scmp.ne.s32.totalorder %s23, %s24
      %p38 = scmp.eq.s32.totalorder %s16, 1
      %p39 = por %p37, %p38
      %p41 = scmp.ne.s32.totalorder %s24, %s40
      %p42 = scmp.eq.s32.totalorder %s16, 0
      %p43 = por %p41, %p42
      %s44 = ssub.s32 %s10, %s17
      %p45 = scmp.eq.s32.totalorder %s44, 0
      %s47 = sadd.s32 %s46, 1
      %s48 = scalar_select %p45, %s46, %s47
      %p51 = pneg %p45
      %p52 = scmp.eq.s32.totalorder %s10, 1
      %p53 = por %p51, %p52
      %p54 = scmp.ne.s32.totalorder %s46, %s49
      %p55 = scmp.eq.s32.totalorder %s10, 0
      %p56 = por %p54, %p55
      %p57 = scmp.ne.s32.totalorder %s46, %s49
      %p58 = scmp.eq.s32.totalorder %s15, 1
      %p59 = por %p57, %p58
      %p60 = scmp.ne.s32.totalorder %s49, %s50
      %p61 = scmp.eq.s32.totalorder %s15, 0
      %p62 = por %p60, %p61
      %p63 = scmp.ne.s32.totalorder %s49, %s50
      %p64 = scmp.eq.s32.totalorder %s16, 1
      %p65 = por %p63, %p64
      %p67 = scmp.ne.s32.totalorder %s50, %s66
      %p68 = scmp.eq.s32.totalorder %s16, 0
      %p69 = por %p67, %p68
      %p70 = scmp.le.s32.totalorder 1, %s10
      %p71 = scmp.lt.s32.totalorder %s10, 3
      %p72 = pnand %p70, %p71
      %p73 = pneg %p72
      // Predicated region
      $region9: #{tpu_custom_call.1} parent=5 // pred_check
        _
      $region10: #{tpu_custom_call.1} parent=5 // pred_check_branch
        %75 = sbr.rel (%p72) target = $region12
      $region11: #{tpu_custom_call.1} parent=5 // pred_region
        %s76 = ssub.s32 %s10, 1
      $region12: #{tpu_custom_call.1} parent=5 // pred_fallthru
        _
      %p77 = scmp.lt.s32.totalorder %s10, 2
      // Predicated region
      $region13: #{tpu_custom_call.1} parent=5 // pred_check
        %p78 = pneg %p77
      $region14: #{tpu_custom_call.1} parent=5 // pred_check_branch
        %80 = sbr.rel (%p78) target = $region16
      $region15: #{tpu_custom_call.1} parent=5 // pred_region
        // Predicated region
        $region17: #{tpu_custom_call.1} parent=15 // pred_check
          %p81 = pneg %p30
        $region18: #{tpu_custom_call.1} parent=15 // pred_check_branch
          %83 = sbr.rel (%p81) target = $region20
        $region19: #{tpu_custom_call.1} parent=15 // pred_region
          %s84 = sand.u32 %s20, 1
          %s85 = scalar_lea.sflag [#allocation3], %s84
          %s86 = sand.u32 %s20, 1
          %s87 = smul.addr %s86, 4
          %s88 = scalar_lea.vmem [#allocation2], %s87
          %s89 = smul.u32 4, %s10
          %91 = vsyncadd %s85, 0
          %s92 = scalar_lea.hbm %s0, %s89
          %s94 = sshll.u32 %s92, 4
          %s95 = int_to_ptr.hbm [resolvable:$true] %s94
          %s96 = sshll.u32 %s88, 4
          %s97 = int_to_ptr.vmem [resolvable:$true] %s96
          %99 = dma.hbm_to_vmem [thread:$0]  %s95, 64, %s97, %s85
        $region20: #{tpu_custom_call.1} parent=15 // pred_fallthru
          _
      $region16: #{tpu_custom_call.1} parent=5 // pred_fallthru
        _
      %p100 = scmp.le.s32.totalorder 1, %s10
      %p101 = scmp.lt.s32.totalorder %s10, 3
      %p102 = pnand %p100, %p101
      %p103 = pneg %p102
      // Predicated region
      $region21: #{tpu_custom_call.1} parent=5 // pred_check
        _
      $region22: #{tpu_custom_call.1} parent=5 // pred_check_branch
        %105 = sbr.rel (%p102) target = $region24
      $region23: #{tpu_custom_call.1} parent=5 // pred_region
        %s106 = ssub.s32 %s10, 1
        %s107 = sand.u32 %s23, 1
        %s108 = scalar_lea.sflag [#allocation3], %s107
        %s109 = sand.u32 %s23, 1
        %s110 = smul.addr %s109, 4
        %s111 = scalar_lea.vmem [#allocation2], %s110
        // Predicated region
        $region25: #{tpu_custom_call.1} parent=23 // pred_check
          %p112 = pneg %p36
        $region26: #{tpu_custom_call.1} parent=23 // pred_check_branch
          %114 = sbr.rel (%p112) target = $region28
        $region27: #{tpu_custom_call.1} parent=23 // pred_region
          %116 = dma.done %s108, 64
        $region28: #{tpu_custom_call.1} parent=23 // pred_fallthru
          _
        %s117 = sand.u32 %s23, 1
        %s118 = scalar_lea.sflag [#allocation3], %s117
        %s119 = sand.u32 %s23, 1
        %s120 = smul.addr %s119, 4
        %s121 = scalar_lea.vmem [#allocation2], %s120
        %p122 = pneg %p36
        %p123 = pneg %p33
        %p124 = pneg %p62
        %p125 = pneg %p59
        %s126 = sand.u32 %s49, 1
        %s127 = sand.u32 %s49, 1
        %s128 = smul.addr %s127, 512
        %s129 = scalar_lea.vmem [#allocation4], %s128
        %s130 = smul.u32 4, %s15
        %s131 = smul.u32 64, %s15
        %s132 = ssub.s32 125, %s131
        %p133 = scmp.lt.s32.totalorder %s132, 64
        %s134 = scalar_select %p133, %s132, 64
        %s135 = smul.u32 8, %s134
        %v136 = vlaneseq
        %v137 = vshrl.u32 %v136, 7
        %v138 = vadd.s32 %v137, 8
        %v139 = vadd.s32 %v137, 16
        %v140 = vadd.s32 %v137, 24
        %v141 = vadd.s32 %v137, 32
        %v142 = vcvt.s32.f32 %v137
        %v143 = vcvt.s32.f32 %v138
        %v144 = vcvt.s32.f32 %v139
        %v145 = vcvt.s32.f32 %v140
        %v146 = vcvt.s32.f32 %v141
        %v147 = vmul.f32 %v142, 0.051282052
        %v148 = vmul.f32 %v143, 0.051282052
        %v149 = vmul.f32 %v144, 0.051282052
        %v150 = vmul.f32 %v145, 0.051282052
        %v151 = vmul.f32 %v146, 0.051282052
        %v152 = vadd.f32 %v147, -1.0
        %v153 = vadd.f32 %v148, -1.0
        %v154 = vadd.f32 %v149, -1.0
        %v155 = vadd.f32 %v150, -1.0
        %v156 = vadd.f32 %v151, -1.0
        %v157 = vld [vmem:[%s111] sm:$0xf]
        %v159 = vperm.slane %v157, 0
        %v160 = vperm.slane %v157, 1
        %v161 = vperm.slane %v157, 2
        %v162 = vperm.slane %v157, 3
        %v167 = vsub.f32 %v159, %v152
        %v168 = vsub.f32 %v160, %v152
        %v169 = vsub.f32 %v161, %v152
        %v170 = vsub.f32 %v162, %v152
        %v171 = vsub.f32 %v159, %v153
        %v172 = vsub.f32 %v160, %v153
        %v173 = vsub.f32 %v161, %v153
        %v174 = vsub.f32 %v162, %v153
        %v175 = vsub.f32 %v159, %v154
        %v176 = vsub.f32 %v160, %v154
        %v177 = vsub.f32 %v161, %v154
        %v178 = vsub.f32 %v162, %v154
        %v179 = vsub.f32 %v159, %v155
        %v180 = vsub.f32 %v160, %v155
        %v181 = vsub.f32 %v161, %v155
        %v182 = vsub.f32 %v162, %v155
        %v183 = vsub.f32 %v159, %v156
        %v184 = vsub.f32 %v160, %v156
        %v185 = vsub.f32 %v161, %v156
        %v186 = vsub.f32 %v162, %v156
        %v187 = vmul.f32 %v167, -19.5
        %v188 = vmul.f32 %v168, -19.5
        %v189 = vmul.f32 %v169, -19.5
        %v190 = vmul.f32 %v170, -19.5
        %v191 = vmul.f32 %v171, -19.5
        %v192 = vmul.f32 %v172, -19.5
        %v193 = vmul.f32 %v173, -19.5
        %v194 = vmul.f32 %v174, -19.5
        %v195 = vmul.f32 %v175, -19.5
        %v196 = vmul.f32 %v176, -19.5
        %v197 = vmul.f32 %v177, -19.5
        %v198 = vmul.f32 %v178, -19.5
        %v199 = vmul.f32 %v179, -19.5
        %v200 = vmul.f32 %v180, -19.5
        %v201 = vmul.f32 %v181, -19.5
        %v202 = vmul.f32 %v182, -19.5
        %v203 = vmul.f32 %v183, -19.5
        %v204 = vmul.f32 %v184, -19.5
        %v205 = vmul.f32 %v185, -19.5
        %v206 = vmul.f32 %v186, -19.5
        %v207 = vmul.f32 %v187, %v167
        %v208 = vmul.f32 %v188, %v168
        %v209 = vmul.f32 %v189, %v169
        %v210 = vmul.f32 %v190, %v170
        %v211 = vmul.f32 %v191, %v171
        %v212 = vmul.f32 %v192, %v172
        %v213 = vmul.f32 %v193, %v173
        %v214 = vmul.f32 %v194, %v174
        %v215 = vmul.f32 %v195, %v175
        %v216 = vmul.f32 %v196, %v176
        %v217 = vmul.f32 %v197, %v177
        %v218 = vmul.f32 %v198, %v178
        %v219 = vmul.f32 %v199, %v179
        %v220 = vmul.f32 %v200, %v180
        %v221 = vmul.f32 %v201, %v181
        %v222 = vmul.f32 %v202, %v182
        %v223 = vmul.f32 %v203, %v183
        %v224 = vmul.f32 %v204, %v184
        %v225 = vmul.f32 %v205, %v185
        %v226 = vmul.f32 %v206, %v186
        %v227 = vmul.f32 %v207, 1.442695
        %v228 = vpow.pop %v227
        %v229 = vmul.f32 %v208, 1.442695
        %v230 = vpow.pop %v229
        %v231 = vmul.f32 %v209, 1.442695
        %v232 = vpow.pop %v231
        %v233 = vmul.f32 %v210, 1.442695
        %v234 = vpow.pop %v233
        %v235 = vmul.f32 %v211, 1.442695
        %v236 = vpow.pop %v235
        %v237 = vmul.f32 %v212, 1.442695
        %v238 = vpow.pop %v237
        %v239 = vmul.f32 %v213, 1.442695
        %v240 = vpow.pop %v239
        %v241 = vmul.f32 %v214, 1.442695
        %v242 = vpow.pop %v241
        %v243 = vmul.f32 %v215, 1.442695
        %v244 = vpow.pop %v243
        %v245 = vmul.f32 %v216, 1.442695
        %v246 = vpow.pop %v245
        %v247 = vmul.f32 %v217, 1.442695
        %v248 = vpow.pop %v247
        %v249 = vmul.f32 %v218, 1.442695
        %v250 = vpow.pop %v249
        %v251 = vmul.f32 %v219, 1.442695
        %v252 = vpow.pop %v251
        %v253 = vmul.f32 %v220, 1.442695
        %v254 = vpow.pop %v253
        %v255 = vmul.f32 %v221, 1.442695
        %v256 = vpow.pop %v255
        %v257 = vmul.f32 %v222, 1.442695
        %v258 = vpow.pop %v257
        %v259 = vmul.f32 %v223, 1.442695
        %v260 = vpow.pop %v259
        %v261 = vmul.f32 %v224, 1.442695
        %v262 = vpow.pop %v261
        %v263 = vmul.f32 %v225, 1.442695
        %v264 = vpow.pop %v263
        %v265 = vmul.f32 %v226, 1.442695
        %v266 = vpow.pop %v265
        %267 = vxpose.xlu0.b32.start [1/16] %v228, 128
        %268 = vxpose.xlu0.b32.cont [2/16] %v236, 128
        %269 = vxpose.xlu0.b32.cont [3/16] %v244, 128
        %270 = vxpose.xlu0.b32.cont [4/16] %v252, 128
        %271 = vxpose.xlu0.b32.cont [5/16] %v260, 128
        %272 = vxpose.xlu0.b32.cont [6/16] 0.0, 128
        %273 = vxpose.xlu0.b32.cont [7/16] 0.0, 128
        %274 = vxpose.xlu0.b32.cont [8/16] 0.0, 128
        %275 = vxpose.xlu0.b32.cont [9/16] 0.0, 128
        %276 = vxpose.xlu0.b32.cont [10/16] 0.0, 128
        %277 = vxpose.xlu0.b32.cont [11/16] 0.0, 128
        %278 = vxpose.xlu0.b32.cont [12/16] 0.0, 128
        %279 = vxpose.xlu0.b32.cont [13/16] 0.0, 128
        %280 = vxpose.xlu0.b32.cont [14/16] 0.0, 128
        %281 = vxpose.xlu0.b32.cont [15/16] 0.0, 128
        %282 = vxpose.xlu0.b32.end [16/16] 0.0, 128
        %v283 = vpop.trf.xlu0
        %v284 = vpop.trf.xlu0
        %v285 = vpop.trf.xlu0
        %v286 = vpop.trf.xlu0
        %v287 = vpop.trf.xlu0
        %v288 = vpop.trf.xlu0
        %v289 = vpop.trf.xlu0
        %v290 = vpop.trf.xlu0
        %v291 = vpop.trf.xlu0
        %v292 = vpop.trf.xlu0
        %v293 = vpop.trf.xlu0
        %v294 = vpop.trf.xlu0
        %v295 = vpop.trf.xlu0
        %v296 = vpop.trf.xlu0
        %v297 = vpop.trf.xlu0
        %v298 = vpop.trf.xlu0
        %299 = vxpose.xlu0.b32.start [1/16] %v230, 128
        %300 = vxpose.xlu0.b32.cont [2/16] %v238, 128
        %301 = vxpose.xlu0.b32.cont [3/16] %v246, 128
        %302 = vxpose.xlu0.b32.cont [4/16] %v254, 128
        %303 = vxpose.xlu0.b32.cont [5/16] %v262, 128
        %304 = vxpose.xlu0.b32.cont [6/16] 0.0, 128
        %305 = vxpose.xlu0.b32.cont [7/16] 0.0, 128
        %306 = vxpose.xlu0.b32.cont [8/16] 0.0, 128
        %307 = vxpose.xlu0.b32.cont [9/16] 0.0, 128
        %308 = vxpose.xlu0.b32.cont [10/16] 0.0, 128
        %309 = vxpose.xlu0.b32.cont [11/16] 0.0, 128
        %310 = vxpose.xlu0.b32.cont [12/16] 0.0, 128
        %311 = vxpose.xlu0.b32.cont [13/16] 0.0, 128
        %312 = vxpose.xlu0.b32.cont [14/16] 0.0, 128
        %313 = vxpose.xlu0.b32.cont [15/16] 0.0, 128
        %314 = vxpose.xlu0.b32.end [16/16] 0.0, 128
        %v315 = vpop.trf.xlu0
        %v316 = vpop.trf.xlu0
        %v317 = vpop.trf.xlu0
        %v318 = vpop.trf.xlu0
        %v319 = vpop.trf.xlu0
        %v320 = vpop.trf.xlu0
        %v321 = vpop.trf.xlu0
        %v322 = vpop.trf.xlu0
        %v323 = vpop.trf.xlu0
        %v324 = vpop.trf.xlu0
        %v325 = vpop.trf.xlu0
        %v326 = vpop.trf.xlu0
        %v327 = vpop.trf.xlu0
        %v328 = vpop.trf.xlu0
        %v329 = vpop.trf.xlu0
        %v330 = vpop.trf.xlu0
        %331 = vxpose.xlu0.b32.start [1/16] %v232, 128
        %332 = vxpose.xlu0.b32.cont [2/16] %v240, 128
        %333 = vxpose.xlu0.b32.cont [3/16] %v248, 128
        %334 = vxpose.xlu0.b32.cont [4/16] %v256, 128
        %335 = vxpose.xlu0.b32.cont [5/16] %v264, 128
        %336 = vxpose.xlu0.b32.cont [6/16] 0.0, 128
        %337 = vxpose.xlu0.b32.cont [7/16] 0.0, 128
        %338 = vxpose.xlu0.b32.cont [8/16] 0.0, 128
        %339 = vxpose.xlu0.b32.cont [9/16] 0.0, 128
        %340 = vxpose.xlu0.b32.cont [10/16] 0.0, 128
        %341 = vxpose.xlu0.b32.cont [11/16] 0.0, 128
        %342 = vxpose.xlu0.b32.cont [12/16] 0.0, 128
        %343 = vxpose.xlu0.b32.cont [13/16] 0.0, 128
        %344 = vxpose.xlu0.b32.cont [14/16] 0.0, 128
        %345 = vxpose.xlu0.b32.cont [15/16] 0.0, 128
        %346 = vxpose.xlu0.b32.end [16/16] 0.0, 128
        %v347 = vpop.trf.xlu0
        %v348 = vpop.trf.xlu0
        %v349 = vpop.trf.xlu0
        %v350 = vpop.trf.xlu0
        %v351 = vpop.trf.xlu0
        %v352 = vpop.trf.xlu0
        %v353 = vpop.trf.xlu0
        %v354 = vpop.trf.xlu0
        %v355 = vpop.trf.xlu0
        %v356 = vpop.trf.xlu0
        %v357 = vpop.trf.xlu0
        %v358 = vpop.trf.xlu0
        %v359 = vpop.trf.xlu0
        %v360 = vpop.trf.xlu0
        %v361 = vpop.trf.xlu0
        %v362 = vpop.trf.xlu0
        %363 = vxpose.xlu0.b32.start [1/16] %v234, 128
        %364 = vxpose.xlu0.b32.cont [2/16] %v242, 128
        %365 = vxpose.xlu0.b32.cont [3/16] %v250, 128
        %366 = vxpose.xlu0.b32.cont [4/16] %v258, 128
        %367 = vxpose.xlu0.b32.cont [5/16] %v266, 128
        %368 = vxpose.xlu0.b32.cont [6/16] 0.0, 128
        %369 = vxpose.xlu0.b32.cont [7/16] 0.0, 128
        %370 = vxpose.xlu0.b32.cont [8/16] 0.0, 128
        %371 = vxpose.xlu0.b32.cont [9/16] 0.0, 128
        %372 = vxpose.xlu0.b32.cont [10/16] 0.0, 128
        %373 = vxpose.xlu0.b32.cont [11/16] 0.0, 128
        %374 = vxpose.xlu0.b32.cont [12/16] 0.0, 128
        %375 = vxpose.xlu0.b32.cont [13/16] 0.0, 128
        %376 = vxpose.xlu0.b32.cont [14/16] 0.0, 128
        %377 = vxpose.xlu0.b32.cont [15/16] 0.0, 128
        %378 = vxpose.xlu0.b32.end [16/16] 0.0, 128
        %v379 = vpop.trf.xlu0
        %v380 = vpop.trf.xlu0
        %v381 = vpop.trf.xlu0
        %v382 = vpop.trf.xlu0
        %v383 = vpop.trf.xlu0
        %v384 = vpop.trf.xlu0
        %v385 = vpop.trf.xlu0
        %v386 = vpop.trf.xlu0
        %v387 = vpop.trf.xlu0
        %v388 = vpop.trf.xlu0
        %v389 = vpop.trf.xlu0
        %v390 = vpop.trf.xlu0
        %v391 = vpop.trf.xlu0
        %v392 = vpop.trf.xlu0
        %v393 = vpop.trf.xlu0
        %v394 = vpop.trf.xlu0
        %vm395 = vcmask 326656
        %396 = vst.msk [vmem:[%s129] sm:$0xff] %vm395, %v283
        %397 = vst.msk [vmem:[%s129 + $0x8] sm:$0xff] %vm395, %v284
        %398 = vst.msk [vmem:[%s129 + $0x10] sm:$0xff] %vm395, %v285
        %399 = vst.msk [vmem:[%s129 + $0x18] sm:$0xff] %vm395, %v286
        %400 = vst.msk [vmem:[%s129 + $0x20] sm:$0xff] %vm395, %v287
        %401 = vst.msk [vmem:[%s129 + $0x28] sm:$0xff] %vm395, %v288
        %402 = vst.msk [vmem:[%s129 + $0x30] sm:$0xff] %vm395, %v289
        %403 = vst.msk [vmem:[%s129 + $0x38] sm:$0xff] %vm395, %v290
        %404 = vst.msk [vmem:[%s129 + $0x40] sm:$0xff] %vm395, %v291
        %405 = vst.msk [vmem:[%s129 + $0x48] sm:$0xff] %vm395, %v292
        %406 = vst.msk [vmem:[%s129 + $0x50] sm:$0xff] %vm395, %v293
        %407 = vst.msk [vmem:[%s129 + $0x58] sm:$0xff] %vm395, %v294
        %408 = vst.msk [vmem:[%s129 + $0x60] sm:$0xff] %vm395, %v295
        %409 = vst.msk [vmem:[%s129 + $0x68] sm:$0xff] %vm395, %v296
        %410 = vst.msk [vmem:[%s129 + $0x70] sm:$0xff] %vm395, %v297
        %411 = vst.msk [vmem:[%s129 + $0x78] sm:$0xff] %vm395, %v298
        %412 = vst.msk [vmem:[%s129 + $0x80] sm:$0xff] %vm395, %v315
        %413 = vst.msk [vmem:[%s129 + $0x88] sm:$0xff] %vm395, %v316
        %414 = vst.msk [vmem:[%s129 + $0x90] sm:$0xff] %vm395, %v317
        %415 = vst.msk [vmem:[%s129 + $0x98] sm:$0xff] %vm395, %v318
        %416 = vst.msk [vmem:[%s129 + $0xa0] sm:$0xff] %vm395, %v319
        %417 = vst.msk [vmem:[%s129 + $0xa8] sm:$0xff] %vm395, %v320
        %418 = vst.msk [vmem:[%s129 + $0xb0] sm:$0xff] %vm395, %v321
        %419 = vst.msk [vmem:[%s129 + $0xb8] sm:$0xff] %vm395, %v322
        %420 = vst.msk [vmem:[%s129 + $0xc0] sm:$0xff] %vm395, %v323
        %421 = vst.msk [vmem:[%s129 + $0xc8] sm:$0xff] %vm395, %v324
        %422 = vst.msk [vmem:[%s129 + $0xd0] sm:$0xff] %vm395, %v325
        %423 = vst.msk [vmem:[%s129 + $0xd8] sm:$0xff] %vm395, %v326
        %424 = vst.msk [vmem:[%s129 + $0xe0] sm:$0xff] %vm395, %v327
        %425 = vst.msk [vmem:[%s129 + $0xe8] sm:$0xff] %vm395, %v328
        %426 = vst.msk [vmem:[%s129 + $0xf0] sm:$0xff] %vm395, %v329
        %427 = vst.msk [vmem:[%s129 + $0xf8] sm:$0xff] %vm395, %v330
        %428 = vst.msk [vmem:[%s129 + $0x100] sm:$0xff] %vm395, %v347
        %429 = vst.msk [vmem:[%s129 + $0x108] sm:$0xff] %vm395, %v348
        %430 = vst.msk [vmem:[%s129 + $0x110] sm:$0xff] %vm395, %v349
        %431 = vst.msk [vmem:[%s129 + $0x118] sm:$0xff] %vm395, %v350
        %432 = vst.msk [vmem:[%s129 + $0x120] sm:$0xff] %vm395, %v351
        %433 = vst.msk [vmem:[%s129 + $0x128] sm:$0xff] %vm395, %v352
        %434 = vst.msk [vmem:[%s129 + $0x130] sm:$0xff] %vm395, %v353
        %435 = vst.msk [vmem:[%s129 + $0x138] sm:$0xff] %vm395, %v354
        %436 = vst.msk [vmem:[%s129 + $0x140] sm:$0xff] %vm395, %v355
        %437 = vst.msk [vmem:[%s129 + $0x148] sm:$0xff] %vm395, %v356
        %438 = vst.msk [vmem:[%s129 + $0x150] sm:$0xff] %vm395, %v357
        %439 = vst.msk [vmem:[%s129 + $0x158] sm:$0xff] %vm395, %v358
        %440 = vst.msk [vmem:[%s129 + $0x160] sm:$0xff] %vm395, %v359
        %441 = vst.msk [vmem:[%s129 + $0x168] sm:$0xff] %vm395, %v360
        %442 = vst.msk [vmem:[%s129 + $0x170] sm:$0xff] %vm395, %v361
        %443 = vst.msk [vmem:[%s129 + $0x178] sm:$0xff] %vm395, %v362
        %444 = vst.msk [vmem:[%s129 + $0x180] sm:$0xff] %vm395, %v379
        %445 = vst.msk [vmem:[%s129 + $0x188] sm:$0xff] %vm395, %v380
        %446 = vst.msk [vmem:[%s129 + $0x190] sm:$0xff] %vm395, %v381
        %447 = vst.msk [vmem:[%s129 + $0x198] sm:$0xff] %vm395, %v382
        %448 = vst.msk [vmem:[%s129 + $0x1a0] sm:$0xff] %vm395, %v383
        %449 = vst.msk [vmem:[%s129 + $0x1a8] sm:$0xff] %vm395, %v384
        %450 = vst.msk [vmem:[%s129 + $0x1b0] sm:$0xff] %vm395, %v385
        %451 = vst.msk [vmem:[%s129 + $0x1b8] sm:$0xff] %vm395, %v386
        %452 = vst.msk [vmem:[%s129 + $0x1c0] sm:$0xff] %vm395, %v387
        %453 = vst.msk [vmem:[%s129 + $0x1c8] sm:$0xff] %vm395, %v388
        %454 = vst.msk [vmem:[%s129 + $0x1d0] sm:$0xff] %vm395, %v389
        %455 = vst.msk [vmem:[%s129 + $0x1d8] sm:$0xff] %vm395, %v390
        %456 = vst.msk [vmem:[%s129 + $0x1e0] sm:$0xff] %vm395, %v391
        %457 = vst.msk [vmem:[%s129 + $0x1e8] sm:$0xff] %vm395, %v392
        %458 = vst.msk [vmem:[%s129 + $0x1f0] sm:$0xff] %vm395, %v393
        %459 = vst.msk [vmem:[%s129 + $0x1f8] sm:$0xff] %vm395, %v394
        %s460 = sand.u32 %s49, 1
        %s461 = sand.u32 %s49, 1
        %s462 = smul.addr %s461, 512
        %s463 = scalar_lea.vmem [#allocation4], %s462
        // Predicated region
        $region29: #{tpu_custom_call.1} parent=23 // pred_check
          %p464 = pneg %p59
        $region30: #{tpu_custom_call.1} parent=23 // pred_check_branch
          %466 = sbr.rel (%p464) target = $region32
        $region31: #{tpu_custom_call.1} parent=23 // pred_region
          %s467 = smul.u32 64, %s15
          %s468 = ssub.s32 125, %s467
          %p469 = scmp.lt.s32.totalorder %s468, 64
          %s470 = scalar_select %p469, %s468, 64
          %s471 = smul.u32 8, %s470
          %p472 = scmp.ne.s32.totalorder 0, %s471
          %s473 = smul.addr %s467, 8
          %s474 = scalar_lea.vmem %s1, %s473
          // Predicated region
          $region33: #{tpu_custom_call.1} parent=31 // pred_check
            %p475 = pneg %p472
          $region34: #{tpu_custom_call.1} parent=31 // pred_check_branch
            %477 = sbr.rel (%p475) target = $region36
          $region35: #{tpu_custom_call.1} parent=31 // pred_region
            // Predicated region
            $region37: #{tpu_custom_call.1} parent=35 // pred_check
              _
            $region38: #{tpu_custom_call.1} parent=35 // pred_check_branch
              %479 = sbr.rel (0) target = $region40
            $region39: #{tpu_custom_call.1} parent=35 // pred_region
              // Predicated region
              $region59: #{tpu_custom_call.1} parent=39 // pred_check
                _
              $region60: #{tpu_custom_call.1} parent=39 // pred_check_branch
                %591 = sbr.rel (0) target = $region62
              $region61: #{tpu_custom_call.1} parent=39 // pred_region
                %s592 = sshrl.u32 %s470, 5
                // While loop
                $region63: #{tpu_custom_call.1} parent=61 // loop_pre_header
                  _
                $region64: #{tpu_custom_call.1} parent=61 // loop_header
                  %s594 = sphi 0, %s596
                  %p595 = scmp.ge.s32.totalorder %s594, %s592
                  %s599 = sphi 0, %s668
                  %s600 = sphi %s463, %s671
                  %s601 = sphi %s474, %s672
                $region65: #{tpu_custom_call.1} parent=61 // loop_header_branch
                  %598 = sbr.rel (%p595) target = $region69
                $region66: #{tpu_custom_call.1} parent=61 // loop_body
                  %v602 = vld [vmem:[%s600] sm:$0xff]
                  %603 = vst [vmem:[%s601] sm:$0xff] %v602
                  %v604 = vld [vmem:[%s600 + $0x8] sm:$0xff]
                  %605 = vst [vmem:[%s601 + $0x8] sm:$0xff] %v604
                  %v606 = vld [vmem:[%s600 + $0x10] sm:$0xff]
                  %607 = vst [vmem:[%s601 + $0x10] sm:$0xff] %v606
                  %v608 = vld [vmem:[%s600 + $0x18] sm:$0xff]
                  %609 = vst [vmem:[%s601 + $0x18] sm:$0xff] %v608
                  %v610 = vld [vmem:[%s600 + $0x20] sm:$0xff]
                  %611 = vst [vmem:[%s601 + $0x20] sm:$0xff] %v610
                  %v612 = vld [vmem:[%s600 + $0x28] sm:$0xff]
                  %613 = vst [vmem:[%s601 + $0x28] sm:$0xff] %v612
                  %v614 = vld [vmem:[%s600 + $0x30] sm:$0xff]
                  %615 = vst [vmem:[%s601 + $0x30] sm:$0xff] %v614
                  %v616 = vld [vmem:[%s600 + $0x38] sm:$0xff]
                  %617 = vst [vmem:[%s601 + $0x38] sm:$0xff] %v616
                  %v618 = vld [vmem:[%s600 + $0x40] sm:$0xff]
                  %619 = vst [vmem:[%s601 + $0x40] sm:$0xff] %v618
                  %v620 = vld [vmem:[%s600 + $0x48] sm:$0xff]
                  %621 = vst [vmem:[%s601 + $0x48] sm:$0xff] %v620
                  %v622 = vld [vmem:[%s600 + $0x50] sm:$0xff]
                  %623 = vst [vmem:[%s601 + $0x50] sm:$0xff] %v622
                  %v624 = vld [vmem:[%s600 + $0x58] sm:$0xff]
                  %625 = vst [vmem:[%s601 + $0x58] sm:$0xff] %v624
                  %v626 = vld [vmem:[%s600 + $0x60] sm:$0xff]
                  %627 = vst [vmem:[%s601 + $0x60] sm:$0xff] %v626
                  %v628 = vld [vmem:[%s600 + $0x68] sm:$0xff]
                  %629 = vst [vmem:[%s601 + $0x68] sm:$0xff] %v628
                  %v630 = vld [vmem:[%s600 + $0x70] sm:$0xff]
                  %631 = vst [vmem:[%s601 + $0x70] sm:$0xff] %v630
                  %v632 = vld [vmem:[%s600 + $0x78] sm:$0xff]
                  %633 = vst [vmem:[%s601 + $0x78] sm:$0xff] %v632
                  %v634 = vld [vmem:[%s600 + $0x80] sm:$0xff]
                  %635 = vst [vmem:[%s601 + $0x80] sm:$0xff] %v634
                  %v636 = vld [vmem:[%s600 + $0x88] sm:$0xff]
                  %637 = vst [vmem:[%s601 + $0x88] sm:$0xff] %v636
                  %v638 = vld [vmem:[%s600 + $0x90] sm:$0xff]
                  %639 = vst [vmem:[%s601 + $0x90] sm:$0xff] %v638
                  %v640 = vld [vmem:[%s600 + $0x98] sm:$0xff]
                  %641 = vst [vmem:[%s601 + $0x98] sm:$0xff] %v640
                  %v642 = vld [vmem:[%s600 + $0xa0] sm:$0xff]
                  %643 = vst [vmem:[%s601 + $0xa0] sm:$0xff] %v642
                  %v644 = vld [vmem:[%s600 + $0xa8] sm:$0xff]
                  %645 = vst [vmem:[%s601 + $0xa8] sm:$0xff] %v644
                  %v646 = vld [vmem:[%s600 + $0xb0] sm:$0xff]
                  %647 = vst [vmem:[%s601 + $0xb0] sm:$0xff] %v646
                  %v648 = vld [vmem:[%s600 + $0xb8] sm:$0xff]
                  %649 = vst [vmem:[%s601 + $0xb8] sm:$0xff] %v648
                  %v650 = vld [vmem:[%s600 + $0xc0] sm:$0xff]
                  %651 = vst [vmem:[%s601 + $0xc0] sm:$0xff] %v650
                  %v652 = vld [vmem:[%s600 + $0xc8] sm:$0xff]
                  %653 = vst [vmem:[%s601 + $0xc8] sm:$0xff] %v652
                  %v654 = vld [vmem:[%s600 + $0xd0] sm:$0xff]
                  %655 = vst [vmem:[%s601 + $0xd0] sm:$0xff] %v654
                  %v656 = vld [vmem:[%s600 + $0xd8] sm:$0xff]
                  %657 = vst [vmem:[%s601 + $0xd8] sm:$0xff] %v656
                  %v658 = vld [vmem:[%s600 + $0xe0] sm:$0xff]
                  %659 = vst [vmem:[%s601 + $0xe0] sm:$0xff] %v658
                  %v660 = vld [vmem:[%s600 + $0xe8] sm:$0xff]
                  %661 = vst [vmem:[%s601 + $0xe8] sm:$0xff] %v660
                  %v662 = vld [vmem:[%s600 + $0xf0] sm:$0xff]
                  %663 = vst [vmem:[%s601 + $0xf0] sm:$0xff] %v662
                  %v664 = vld [vmem:[%s600 + $0xf8] sm:$0xff]
                  %665 = vst [vmem:[%s601 + $0xf8] sm:$0xff] %v664
                  %s666 = sadd.s32 1, %s599
                  %p667 = scmp.ge.s32.totalorder %s666, %s592
                  %s668 = scalar_select %p667, 0, %s666
                  %s669 = smul.u32 %s668, 256
                  %s670 = smul.u32 %s668, 256
                  %s671 = scalar_lea.vmem %s463, %s669 [#allocation4]
                  %s672 = scalar_lea.vmem %s474, %s670
                $region67: #{tpu_custom_call.1} parent=61 // loop_footer
                  %s596 = sadd.s32 %s594, 1
                $region68: #{tpu_custom_call.1} parent=61 // loop_footer_branch
                  %593 = sbr.rel target = $region64
                $region69: #{tpu_custom_call.1} parent=61 // loop_exit
                  _
                %s673 = sshrl.u32 %s470, 5
                %s674 = sand.u32 %s470, 31
                %s675 = smul.u32 %s673, 32
                %s676 = smul.u32 8, %s675
                %s677 = scalar_lea.vmem %s463, %s676 [#allocation4]
                %s678 = smul.u32 8, %s675
                %s679 = scalar_lea.vmem %s474, %s678
                // While loop
                $region70: #{tpu_custom_call.1} parent=61 // loop_pre_header
                  _
                $region71: #{tpu_custom_call.1} parent=61 // loop_header
                  %s681 = sphi 0, %s683
                  %p682 = scmp.ge.s32.totalorder %s681, %s674
                  %s686 = sphi 0, %s693
                  %s687 = sphi %s677, %s696
                  %s688 = sphi %s679, %s697
                $region72: #{tpu_custom_call.1} parent=61 // loop_header_branch
                  %685 = sbr.rel (%p682) target = $region76
                $region73: #{tpu_custom_call.1} parent=61 // loop_body
                  %v689 = vld [vmem:[%s687] sm:$0xff]
                  %690 = vst [vmem:[%s688] sm:$0xff] %v689
                  %s691 = sadd.s32 1, %s686
                  %p692 = scmp.ge.s32.totalorder %s691, %s674
                  %s693 = scalar_select %p692, 0, %s691
                  %s694 = smul.u32 %s693, 8
                  %s695 = smul.u32 %s693, 8
                  %s696 = scalar_lea.vmem %s677, %s694 [#allocation4]
                  %s697 = scalar_lea.vmem %s679, %s695
                $region74: #{tpu_custom_call.1} parent=61 // loop_footer
                  %s683 = sadd.s32 %s681, 1
                $region75: #{tpu_custom_call.1} parent=61 // loop_footer_branch
                  %680 = sbr.rel target = $region71
                $region76: #{tpu_custom_call.1} parent=61 // loop_exit
                  _
              $region62: #{tpu_custom_call.1} parent=39 // pred_fallthru
                _
              // Predicated region
              $region77: #{tpu_custom_call.1} parent=39 // pred_check
                _
              $region78: #{tpu_custom_call.1} parent=39 // pred_check_branch
                %699 = sbr.rel target = $region80
              $region79: #{tpu_custom_call.1} parent=39 // pred_region
                _
              $region80: #{tpu_custom_call.1} parent=39 // pred_fallthru
                _
            $region40: #{tpu_custom_call.1} parent=35 // pred_fallthru
              _
            // Predicated region
            $region41: #{tpu_custom_call.1} parent=35 // pred_check
              _
            $region42: #{tpu_custom_call.1} parent=35 // pred_check_branch
              %481 = sbr.rel target = $region44
            $region43: #{tpu_custom_call.1} parent=35 // pred_region
              %s483 = ssub.s32 256, 1
              %s484 = sshrl.u32 %s470, 5
              // While loop
              $region45: #{tpu_custom_call.1} parent=43 // loop_pre_header
                _
              $region46: #{tpu_custom_call.1} parent=43 // loop_header
                %s486 = sphi 0, %s488
                %p487 = scmp.ge.s32.totalorder %s486, %s484
                %s491 = sphi 0, %s560
                %s492 = sphi %s463, %s563
                %s493 = sphi %s474, %s564
              $region47: #{tpu_custom_call.1} parent=43 // loop_header_branch
                %490 = sbr.rel (%p487) target = $region51
              $region48: #{tpu_custom_call.1} parent=43 // loop_body
                %v494 = vld [vmem:[%s492] sm:%s483]
                %495 = vst [vmem:[%s493] sm:%s483] %v494
                %v496 = vld [vmem:[%s492 + $0x8] sm:%s483]
                %497 = vst [vmem:[%s493 + $0x8] sm:%s483] %v496
                %v498 = vld [vmem:[%s492 + $0x10] sm:%s483]
                %499 = vst [vmem:[%s493 + $0x10] sm:%s483] %v498
                %v500 = vld [vmem:[%s492 + $0x18] sm:%s483]
                %501 = vst [vmem:[%s493 + $0x18] sm:%s483] %v500
                %v502 = vld [vmem:[%s492 + $0x20] sm:%s483]
                %503 = vst [vmem:[%s493 + $0x20] sm:%s483] %v502
                %v504 = vld [vmem:[%s492 + $0x28] sm:%s483]
                %505 = vst [vmem:[%s493 + $0x28] sm:%s483] %v504
                %v506 = vld [vmem:[%s492 + $0x30] sm:%s483]
                %507 = vst [vmem:[%s493 + $0x30] sm:%s483] %v506
                %v508 = vld [vmem:[%s492 + $0x38] sm:%s483]
                %509 = vst [vmem:[%s493 + $0x38] sm:%s483] %v508
                %v510 = vld [vmem:[%s492 + $0x40] sm:%s483]
                %511 = vst [vmem:[%s493 + $0x40] sm:%s483] %v510
                %v512 = vld [vmem:[%s492 + $0x48] sm:%s483]
                %513 = vst [vmem:[%s493 + $0x48] sm:%s483] %v512
                %v514 = vld [vmem:[%s492 + $0x50] sm:%s483]
                %515 = vst [vmem:[%s493 + $0x50] sm:%s483] %v514
                %v516 = vld [vmem:[%s492 + $0x58] sm:%s483]
                %517 = vst [vmem:[%s493 + $0x58] sm:%s483] %v516
                %v518 = vld [vmem:[%s492 + $0x60] sm:%s483]
                %519 = vst [vmem:[%s493 + $0x60] sm:%s483] %v518
                %v520 = vld [vmem:[%s492 + $0x68] sm:%s483]
                %521 = vst [vmem:[%s493 + $0x68] sm:%s483] %v520
                %v522 = vld [vmem:[%s492 + $0x70] sm:%s483]
                %523 = vst [vmem:[%s493 + $0x70] sm:%s483] %v522
                %v524 = vld [vmem:[%s492 + $0x78] sm:%s483]
                %525 = vst [vmem:[%s493 + $0x78] sm:%s483] %v524
                %v526 = vld [vmem:[%s492 + $0x80] sm:%s483]
                %527 = vst [vmem:[%s493 + $0x80] sm:%s483] %v526
                %v528 = vld [vmem:[%s492 + $0x88] sm:%s483]
                %529 = vst [vmem:[%s493 + $0x88] sm:%s483] %v528
                %v530 = vld [vmem:[%s492 + $0x90] sm:%s483]
                %531 = vst [vmem:[%s493 + $0x90] sm:%s483] %v530
                %v532 = vld [vmem:[%s492 + $0x98] sm:%s483]
                %533 = vst [vmem:[%s493 + $0x98] sm:%s483] %v532
                %v534 = vld [vmem:[%s492 + $0xa0] sm:%s483]
                %535 = vst [vmem:[%s493 + $0xa0] sm:%s483] %v534
                %v536 = vld [vmem:[%s492 + $0xa8] sm:%s483]
                %537 = vst [vmem:[%s493 + $0xa8] sm:%s483] %v536
                %v538 = vld [vmem:[%s492 + $0xb0] sm:%s483]
                %539 = vst [vmem:[%s493 + $0xb0] sm:%s483] %v538
                %v540 = vld [vmem:[%s492 + $0xb8] sm:%s483]
                %541 = vst [vmem:[%s493 + $0xb8] sm:%s483] %v540
                %v542 = vld [vmem:[%s492 + $0xc0] sm:%s483]
                %543 = vst [vmem:[%s493 + $0xc0] sm:%s483] %v542
                %v544 = vld [vmem:[%s492 + $0xc8] sm:%s483]
                %545 = vst [vmem:[%s493 + $0xc8] sm:%s483] %v544
                %v546 = vld [vmem:[%s492 + $0xd0] sm:%s483]
                %547 = vst [vmem:[%s493 + $0xd0] sm:%s483] %v546
                %v548 = vld [vmem:[%s492 + $0xd8] sm:%s483]
                %549 = vst [vmem:[%s493 + $0xd8] sm:%s483] %v548
                %v550 = vld [vmem:[%s492 + $0xe0] sm:%s483]
                %551 = vst [vmem:[%s493 + $0xe0] sm:%s483] %v550
                %v552 = vld [vmem:[%s492 + $0xe8] sm:%s483]
                %553 = vst [vmem:[%s493 + $0xe8] sm:%s483] %v552
                %v554 = vld [vmem:[%s492 + $0xf0] sm:%s483]
                %555 = vst [vmem:[%s493 + $0xf0] sm:%s483] %v554
                %v556 = vld [vmem:[%s492 + $0xf8] sm:%s483]
                %557 = vst [vmem:[%s493 + $0xf8] sm:%s483] %v556
                %s558 = sadd.s32 1, %s491
                %p559 = scmp.ge.s32.totalorder %s558, %s484
                %s560 = scalar_select %p559, 0, %s558
                %s561 = smul.u32 %s560, 256
                %s562 = smul.u32 %s560, 256
                %s563 = scalar_lea.vmem %s463, %s561 [#allocation4]
                %s564 = scalar_lea.vmem %s474, %s562
              $region49: #{tpu_custom_call.1} parent=43 // loop_footer
                %s488 = sadd.s32 %s486, 1
              $region50: #{tpu_custom_call.1} parent=43 // loop_footer_branch
                %485 = sbr.rel target = $region46
              $region51: #{tpu_custom_call.1} parent=43 // loop_exit
                _
              %s565 = sshrl.u32 %s470, 5
              %s566 = sand.u32 %s470, 31
              %s567 = smul.u32 %s565, 32
              %s568 = smul.u32 8, %s567
              %s569 = scalar_lea.vmem %s463, %s568 [#allocation4]
              %s570 = smul.u32 8, %s567
              %s571 = scalar_lea.vmem %s474, %s570
              // While loop
              $region52: #{tpu_custom_call.1} parent=43 // loop_pre_header
                _
              $region53: #{tpu_custom_call.1} parent=43 // loop_header
                %s573 = sphi 0, %s575
                %p574 = scmp.ge.s32.totalorder %s573, %s566
                %s578 = sphi 0, %s585
                %s579 = sphi %s569, %s588
                %s580 = sphi %s571, %s589
              $region54: #{tpu_custom_call.1} parent=43 // loop_header_branch
                %577 = sbr.rel (%p574) target = $region58
              $region55: #{tpu_custom_call.1} parent=43 // loop_body
                %v581 = vld [vmem:[%s579] sm:%s483]
                %582 = vst [vmem:[%s580] sm:%s483] %v581
                %s583 = sadd.s32 1, %s578
                %p584 = scmp.ge.s32.totalorder %s583, %s566
                %s585 = scalar_select %p584, 0, %s583
                %s586 = smul.u32 %s585, 8
                %s587 = smul.u32 %s585, 8
                %s588 = scalar_lea.vmem %s569, %s586 [#allocation4]
                %s589 = scalar_lea.vmem %s571, %s587
              $region56: #{tpu_custom_call.1} parent=43 // loop_footer
                %s575 = sadd.s32 %s573, 1
              $region57: #{tpu_custom_call.1} parent=43 // loop_footer_branch
                %572 = sbr.rel target = $region53
              $region58: #{tpu_custom_call.1} parent=43 // loop_exit
                _
            $region44: #{tpu_custom_call.1} parent=35 // pred_fallthru
              _
          $region36: #{tpu_custom_call.1} parent=31 // pred_fallthru
            _
          %700 = vnop
        $region32: #{tpu_custom_call.1} parent=23 // pred_fallthru
          _
      $region24: #{tpu_custom_call.1} parent=5 // pred_fallthru
        _
      %p701 = scmp.le.s32.totalorder 2, %s10
      // Predicated region
      $region81: #{tpu_custom_call.1} parent=5 // pred_check
        %p702 = pneg %p701
      $region82: #{tpu_custom_call.1} parent=5 // pred_check_branch
        %704 = sbr.rel (%p702) target = $region84
      $region83: #{tpu_custom_call.1} parent=5 // pred_region
        %s705 = ssub.s32 %s10, 2
        // Predicated region
        $region85: #{tpu_custom_call.1} parent=83 // pred_check
          %p706 = pneg %p65
        $region86: #{tpu_custom_call.1} parent=83 // pred_check_branch
          %708 = sbr.rel (%p706) target = $region88
        $region87: #{tpu_custom_call.1} parent=83 // pred_region
          %s709 = sand.u32 %s50, 1
          %s710 = sand.u32 %s50, 1
          %s711 = smul.addr %s710, 512
          %s712 = scalar_lea.vmem [#allocation4], %s711
        $region88: #{tpu_custom_call.1} parent=83 // pred_fallthru
          _
      $region84: #{tpu_custom_call.1} parent=5 // pred_fallthru
        _
    $region6: #{tpu_custom_call.1} parent=1 // loop_footer
      %s14 = sadd.s32 1, %s10
    $region7: #{tpu_custom_call.1} parent=1 // loop_footer_branch
      %9 = sbr.rel target = $region3
    $region8: #{tpu_custom_call.1} parent=1 // loop_exit
      _
    %713 = vsyncpa [#allocation3], 1
    %s714 = scalar_lea.sflag [#allocation3], 1
    %715 = vsyncpa %s714, 1

</llo_original>
